<compile_context>
chip_gen: v5e
topology: v5e:2x2
jax: 0.10.0
libtpu: 0.0.40
codegen_flags: <defaults>
</compile_context>

<pallas_src>
import jax
import jax.numpy as jnp
from jax.experimental import pallas as pl
from jax.experimental.pallas import tpu as pltpu

_MAX_BLOCK_BYTES = 4 * 1024 * 1024      # v7x-safe block size (64 MiB VMEM/TC)
_VMEM_LIMIT_BYTES = 32 * 1024 * 1024    # covers 2 in + 2 out buffers + headroom


def _identity_kernel(x_ref, o_ref):
    # Pure pass-through: VMEM tile copy.
    o_ref[...] = x_ref[...]


def _sublane_multiple(dtype):
    # f32 -> 8 rows per sublane tile, bf16 -> 16, int8/fp8 -> 32.
    return {4: 8, 2: 16, 1: 32}.get(jnp.dtype(dtype).itemsize, 8)


def _copy_2d(x2d):
    """Tiled, lane-dense copy of a (rows, cols) array with cols % 128 == 0."""
    rows, cols = x2d.shape
    itemsize = jnp.dtype(x2d.dtype).itemsize
    sub = _sublane_multiple(x2d.dtype)

    # ~4 MiB blocks; use the full row extent when the array is small
    # (block_shape equal to the array dim bypasses the (8,128) rule).
    target_rows = max(1, _MAX_BLOCK_BYTES // (cols * itemsize))
    if rows <= target_rows:
        block_rows = rows
    else:
        block_rows = max(sub, (target_rows // sub) * sub)
    grid = (pl.cdiv(rows, block_rows),)

    return pl.pallas_call(
        _identity_kernel,
        out_shape=jax.ShapeDtypeStruct((rows, cols), x2d.dtype),
        grid_spec=pltpu.PrefetchScalarGridSpec(
            num_scalar_prefetch=0,
            grid=grid,
            in_specs=[pl.BlockSpec((block_rows, cols), lambda i: (i, 0))],
            out_specs=pl.BlockSpec((block_rows, cols), lambda i: (i, 0)),
        ),
        compiler_params=pltpu.CompilerParams(
            dimension_semantics=("parallel",),
            vmem_limit_bytes=_VMEM_LIMIT_BYTES,
        ),
        input_output_aliases={0: 0},
    )(x2d)


def identity(x):
    """Identity.forward(x) -> x via a Pallas TPU copy kernel."""
    # TODO(synk): in production simply `return x` — no kernel beats zero HBM traffic.
    orig_shape = x.shape
    n = x.size
    if n == 0:
        return x

    # Widest lane dimension in [128, 4096] (multiple of 128) dividing n, so the
    # reshape is metadata-only and the output is lane-dense.
    cols = 0
    for c in (4096, 2048, 1024, 512, 256, 128):
        if n % c == 0:
            cols = c
            break

    if cols:
        return _copy_2d(x.reshape(n // cols, cols)).reshape(orig_shape)

    # Rare path: total size not a multiple of 128.
    itemsize = jnp.dtype(x.dtype).itemsize
    if n * itemsize <= 2 * 1024 * 1024:
        # Single full-array block (block_shape == array shape bypasses the
        # (8,128) constraint) — still no pad/slice passes.
        out = pl.pallas_call(
            _identity_kernel,
            out_shape=jax.ShapeDtypeStruct((1, n), x.dtype),
            input_output_aliases={0: 0},
            compiler_params=pltpu.CompilerParams(
                vmem_limit_bytes=_VMEM_LIMIT_BYTES),
        )(x.reshape(1, n))
        return out.reshape(orig_shape)

    # Large & ragged: pad once to a (rows, 512) rectangle, copy, slice back.
    cols = 512
    sub = _sublane_multiple(x.dtype)
    rows = pl.cdiv(pl.cdiv(n, cols), sub) * sub
    flat = jnp.pad(x.reshape(-1), (0, rows * cols - n))
    out = _copy_2d(flat.reshape(rows, cols))
    return out.reshape(-1)[:n].reshape(orig_shape)


if __name__ == "__main__":
    key = jax.random.PRNGKey(0)
    x = jax.random.normal(key, (2, 4, 16, 16), dtype=jnp.float32)  # NCHW
    y = identity(x)
    jax.block_until_ready(y)
    assert y.shape == x.shape and y.dtype == x.dtype
    assert bool(jnp.all(y == x))
    print("KERNEL_OK")
</pallas_src>

<mosaic_0001>
module attributes {stable_mosaic.version = 11 : i64} {
  func.func @_identity_kernel(%arg0: i32, %arg1: memref<1x2048xf32, #tpu.memory_space<vmem>>, %arg2: memref<1x2048xf32, #tpu.memory_space<vmem>>) attributes {dimension_semantics = [#tpu.dimension_semantics<parallel>], iteration_bounds = array<i64: 1>, scalar_prefetch = 0 : i64, scratch_operands = 0 : i64, tpu.core_type = #tpu.core_type<tc>, window_params = [{transform_indices = @transform_0, window_bounds = array<i64: 1, 2048>}, {transform_indices = @transform_1, window_bounds = array<i64: 1, 2048>}]} {
    %c0 = arith.constant 0 : index
    %c0_0 = arith.constant 0 : index
    %0 = vector.load %arg1[%c0, %c0_0] : memref<1x2048xf32, #tpu.memory_space<vmem>>, vector<1x2048xf32>
    %c0_1 = arith.constant 0 : index
    %c0_2 = arith.constant 0 : index
    %1 = vector.load %arg2[%c0_1, %c0_2] : memref<1x2048xf32, #tpu.memory_space<vmem>>, vector<1x2048xf32>
    tpu.vector_store %arg2[%c0_1, %c0_2], %0 {strides = array<i32>} : memref<1x2048xf32, #tpu.memory_space<vmem>>, vector<1x2048xf32>,
    return
  }
  func.func @transform_0(%arg0: i32) -> (i32, i32) {
    %c0_i32 = arith.constant 0 : i32
    %c0_i32_0 = arith.constant 0 : i32
    return %arg0, %c0_i32 : i32, i32
  }
  func.func @transform_1(%arg0: i32) -> (i32, i32) {
    %c0_i32 = arith.constant 0 : i32
    %c0_i32_0 = arith.constant 0 : i32
    return %arg0, %c0_i32 : i32, i32
  }
}

</mosaic_0001>

<llo_original>
// kernel: tpu_custom_call.1
$region0: #{tpu_custom_call.1}
  #allocation0 [shape = 'u32[]', space=smem, size = 0x4, offset = 0x4, fixed_abs, tag = 'smem constant byte address 0x4 - core index']
  #allocation1 [shape = 'u32[72,128]{1,0:T(1,128)}', space=vmem, size = 0x9000, scoped, tag = 'internal scratch']
  %s0 = inlined_call_operand.hbm [shape: f32[1,2048], index: 0, kind: input, shape index: {}, may-alias: {0,1}]
  %s1 = inlined_call_operand.hbm [shape: f32[1,2048], index: 1, kind: output, shape index: {}, may-alias: {0,1}]
  %s2 = sld [smem:[#allocation0]]
  $region18: #{tpu_custom_call.1} parent=0
    _
  %s4 = ssub.s32 1, %s2
  %s5 = scalar_select 0, %s4, %s2
  $region1: #{tpu_custom_call.1} parent=0
    #allocation2 [shape = 'u8[8192]{0}', space=vmem, size = 0x2000, scoped, tag = 'input window, operand 0, single buffered']
    #allocation3 [shape = 's32[1]{0}', space=sflag, size = 0x4, scoped, tag = 'scoped memory for tpu_custom_call.1']
    #allocation4 [shape = 's32[1]{0}', space=sflag, size = 0x4, scoped, tag = 'scoped memory for tpu_custom_call.1']
    #allocation5 [shape = 'u8[8192]{0}', space=vmem, size = 0x2000, scoped, tag = 'output window, operand 0, single buffered']
    %6 = vsyncpa [#allocation3], 0
    %7 = vsyncpa [#allocation4], 0
    // Predicated region
    $region2: #{tpu_custom_call.1} parent=1 // pred_check
      _
    $region3: #{tpu_custom_call.1} parent=1 // pred_check_branch
      %9 = sbr.rel (0) target = $region5
    $region4: #{tpu_custom_call.1} parent=1 // pred_region
      %11 = vsyncadd [#allocation3], 0
      %s13 = sshll.u32 %s0, 4
      %s14 = int_to_ptr.hbm [resolvable:$true] %s13
      %s15 = sshll.u32 [#allocation2], 4
      %s16 = int_to_ptr.vmem [resolvable:$true] %s15
      %18 = dma.hbm_to_vmem [thread:$0]  %s14, 256, %s16, [#allocation3]
    $region5: #{tpu_custom_call.1} parent=1 // pred_fallthru
      _
    // Predicated region
    $region6: #{tpu_custom_call.1} parent=1 // pred_check
      _
    $region7: #{tpu_custom_call.1} parent=1 // pred_check_branch
      %20 = sbr.rel (0) target = $region9
    $region8: #{tpu_custom_call.1} parent=1 // pred_region
      %22 = dma.done [#allocation3], 256
    $region9: #{tpu_custom_call.1} parent=1 // pred_fallthru
      _
    %v23 = vld [vmem:[#allocation2] sm:$0xff]
    %v24 = vld [vmem:[#allocation2 + $0x8] sm:$0xff]
    %25 = vst [vmem:[#allocation5] sm:$0xff] %v23
    %26 = vst [vmem:[#allocation5 + $0x8] sm:$0xff] %v24
    // Predicated region
    $region10: #{tpu_custom_call.1} parent=1 // pred_check
      _
    $region11: #{tpu_custom_call.1} parent=1 // pred_check_branch
      %28 = sbr.rel (0) target = $region13
    $region12: #{tpu_custom_call.1} parent=1 // pred_region
      %30 = vsyncadd [#allocation4], 0
      %s32 = sshll.u32 [#allocation5], 4
      %s33 = int_to_ptr.vmem [resolvable:$true] %s32
      %s34 = sshll.u32 %s1, 4
      %s35 = int_to_ptr.hbm [resolvable:$true] %s34
      %37 = dma.vmem_to_hbm [thread:$0]  %s33, 256, %s35, [#allocation4]
    $region13: #{tpu_custom_call.1} parent=1 // pred_fallthru
      _
    // Predicated region
    $region14: #{tpu_custom_call.1} parent=1 // pred_check
      _
    $region15: #{tpu_custom_call.1} parent=1 // pred_check_branch
      %39 = sbr.rel (0) target = $region17
    $region16: #{tpu_custom_call.1} parent=1 // pred_region
      %41 = dma.done [#allocation4], 256
    $region17: #{tpu_custom_call.1} parent=1 // pred_fallthru
      _
    %42 = vsyncpa [#allocation3], 1
    %43 = vsyncpa [#allocation4], 1

</llo_original>
